<compile_context>
chip_gen: v7x
topology: tpu7x:2x2x1
jax: 0.10.0
libtpu: 0.0.40
codegen_flags: <defaults>
</compile_context>

<pallas_src>
import functools

import jax
import jax.numpy as jnp
from jax import lax
from jax.experimental import pallas as pl
from jax.experimental.pallas import tpu as pltpu

_TWO_PI = 6.283185307179586
_INV_2POW24 = 1.0 / 16777216.0


def _mix32(v):
    """lowbias32 integer avalanche hash (uint32 -> uint32)."""
    v = v ^ (v >> jnp.uint32(16))
    v = v * jnp.uint32(0x7FEB352D)
    v = v ^ (v >> jnp.uint32(15))
    v = v * jnp.uint32(0x846CA68B)
    v = v ^ (v >> jnp.uint32(16))
    return v


def _gaussian_from_index(idx_u32, seed_u32):
    """Per-element standard-normal sample from a counter-based hash RNG."""
    h = _mix32(idx_u32 ^ seed_u32)
    b1 = _mix32(h ^ jnp.uint32(0x243F6A88))
    b2 = _mix32(h ^ jnp.uint32(0x85A308D3))
    # Top 24 bits -> exactly-representable f32 uniforms.
    f1 = (b1 >> jnp.uint32(8)).astype(jnp.int32).astype(jnp.float32)
    f2 = (b2 >> jnp.uint32(8)).astype(jnp.int32).astype(jnp.float32)
    u1 = (f1 + 1.0) * _INV_2POW24      # (0, 1]  -> log(u1) finite
    u2 = f2 * _INV_2POW24              # [0, 1)
    r = jnp.sqrt(-2.0 * jnp.log(u1))
    return r * jnp.cos(_TWO_PI * u2)   # Box-Muller


def _stoch_relu_kernel(seed_ref, x_ref, o_ref, *, sigma, tile_rows):
    # Block: (tile_rows, 128), lane-dense and (8,128)-aligned.
    x = x_ref[...].astype(jnp.float32)
    shape = x.shape

    # Global flat element index: independent of tiling -> reproducible output.
    row = lax.broadcasted_iota(jnp.int32, shape, 0) + pl.program_id(0) * tile_rows
    lane = lax.broadcasted_iota(jnp.int32, shape, 1)
    idx = (row * 128 + lane).astype(jnp.uint32)

    seed_u = seed_ref[0].astype(jnp.uint32)
    z = _gaussian_from_index(idx, seed_u)

    p0 = 1.0 + jnp.float32(sigma) * z
    o_ref[...] = jnp.maximum(x * p0, 0.0).astype(o_ref.dtype)


def stoch_relu(x, seed=0, sigma=1.0, *, block_rows=512):
    """Stochastic ReLU: relu(x * (1 + sigma * N(0,1))), elementwise.

    Accepts any input shape (N, *); returns the same shape and dtype.
    """
    orig_shape = x.shape
    orig_dtype = x.dtype
    total = x.size

    rows = -(-total // 128)                               # ceil(total / 128)
    tile_rows = min(block_rows, ((rows + 7) // 8) * 8)    # multiple of 8
    rows_p = ((rows + tile_rows - 1) // tile_rows) * tile_rows
    total_p = rows_p * 128

    x_flat = x.reshape(-1)
    if total_p != total:
        x_flat = jnp.pad(x_flat, (0, total_p - total))
    x2 = x_flat.reshape(rows_p, 128)

    seed_arr = jnp.asarray([seed], dtype=jnp.int32)
    kernel = functools.partial(
        _stoch_relu_kernel, sigma=float(sigma), tile_rows=tile_rows
    )

    out2 = pl.pallas_call(
        kernel,
        out_shape=jax.ShapeDtypeStruct((rows_p, 128), orig_dtype),
        grid_spec=pltpu.PrefetchScalarGridSpec(
            num_scalar_prefetch=1,
            grid=(rows_p // tile_rows,),
            in_specs=[pl.BlockSpec((tile_rows, 128), lambda i, seed: (i, 0))],
            out_specs=pl.BlockSpec((tile_rows, 128), lambda i, seed: (i, 0)),
        ),
        compiler_params=pltpu.CompilerParams(
            dimension_semantics=("parallel",),
        ),
    )(seed_arr, x2)

    out_flat = out2.reshape(-1)
    if total_p != total:
        out_flat = out_flat[:total]
    return out_flat.reshape(orig_shape)


def stoch_relu_reference(x, seed=0, sigma=1.0):
    """Pure-JAX reference using the identical counter-based RNG."""
    idx = jnp.arange(x.size, dtype=jnp.uint32).reshape(x.shape)
    z = _gaussian_from_index(idx, jnp.uint32(seed))
    p0 = 1.0 + jnp.float32(sigma) * z
    return jnp.maximum(x.astype(jnp.float32) * p0, 0.0).astype(x.dtype)


if __name__ == "__main__":
    key = jax.random.PRNGKey(0)
    # Input consistent with (N, *): batch=2, channels=4, spatial 16x16.
    x = jax.random.normal(key, (2, 4, 16, 16), dtype=jnp.float32)

    out = stoch_relu(x, seed=0, sigma=1.0)
    out = jax.block_until_ready(out)

    # Sanity checks: same shape/dtype, non-negative (ReLU), finite, non-trivial.
    assert out.shape == x.shape and out.dtype == x.dtype
    assert bool(jnp.all(jnp.isfinite(out)))
    assert bool(jnp.all(out >= 0.0))
    assert bool(jnp.any(out > 0.0))

    # Compare against the pure-JAX reference that shares the RNG definition
    # (tolerance covers TPU transcendental approximation differences).
    ref = stoch_relu_reference(x, seed=0, sigma=1.0)
    assert bool(jnp.allclose(out, ref, rtol=5e-3, atol=5e-3))

    print("KERNEL_OK")
</pallas_src>

<mosaic_0001>
module attributes {stable_mosaic.version = 11 : i64} {
  func.func @_stoch_relu_kernel(%arg0: i32, %arg1: memref<1xi32, #tpu.memory_space<smem>>, %arg2: memref<16x128xf32, #tpu.memory_space<vmem>>, %arg3: memref<16x128xf32, #tpu.memory_space<vmem>>) attributes {dimension_semantics = [#tpu.dimension_semantics<parallel>], iteration_bounds = array<i64: 1>, scalar_prefetch = 1 : i64, scratch_operands = 0 : i64, tpu.core_type = #tpu.core_type<tc>, window_params = [{transform_indices = @transform_0, window_bounds = array<i64: 16, 128>}, {transform_indices = @transform_1, window_bounds = array<i64: 16, 128>}]} {
    %c0 = arith.constant 0 : index
    %c0_0 = arith.constant 0 : index
    %0 = vector.load %arg2[%c0, %c0_0] : memref<16x128xf32, #tpu.memory_space<vmem>>, vector<16x128xf32>
    %1 = tpu.iota {dimensions = array<i32: 0>} : vector<16x128xi32>
    %c16_i32 = arith.constant 16 : i32
    %2 = arith.muli %arg0, %c16_i32 : i32
    %3 = vector.broadcast %2 : i32 to vector<16x128xi32>
    %4 = arith.addi %1, %3 : vector<16x128xi32>
    %5 = tpu.iota {dimensions = array<i32: 1>} : vector<16x128xi32>
    %c128_i32 = arith.constant 128 : i32
    %6 = vector.broadcast %c128_i32 : i32 to vector<16x128xi32>
    %7 = arith.muli %4, %6 : vector<16x128xi32>
    %8 = arith.addi %7, %5 : vector<16x128xi32>
    %c0_1 = arith.constant 0 : index
    %9 = memref.load %arg1[%c0_1] : memref<1xi32, #tpu.memory_space<smem>>
    %10 = vector.broadcast %9 : i32 to vector<16x128xi32>
    %11 = arith.xori %8, %10 : vector<16x128xi32>
    %c16_i32_2 = arith.constant 16 : i32
    %12 = vector.broadcast %c16_i32_2 : i32 to vector<16x128xi32>
    %13 = arith.shrui %11, %12 : vector<16x128xi32>
    %14 = arith.xori %11, %13 : vector<16x128xi32>
    %c2146121005_i32 = arith.constant 2146121005 : i32
    %15 = vector.broadcast %c2146121005_i32 : i32 to vector<16x128xi32>
    %16 = arith.muli %14, %15 : vector<16x128xi32>
    %c15_i32 = arith.constant 15 : i32
    %17 = vector.broadcast %c15_i32 : i32 to vector<16x128xi32>
    %18 = arith.shrui %16, %17 : vector<16x128xi32>
    %19 = arith.xori %16, %18 : vector<16x128xi32>
    %c-2073254261_i32 = arith.constant -2073254261 : i32
    %20 = vector.broadcast %c-2073254261_i32 : i32 to vector<16x128xi32>
    %21 = arith.muli %19, %20 : vector<16x128xi32>
    %c16_i32_3 = arith.constant 16 : i32
    %22 = vector.broadcast %c16_i32_3 : i32 to vector<16x128xi32>
    %23 = arith.shrui %21, %22 : vector<16x128xi32>
    %24 = arith.xori %21, %23 : vector<16x128xi32>
    %c608135816_i32 = arith.constant 608135816 : i32
    %25 = vector.broadcast %c608135816_i32 : i32 to vector<16x128xi32>
    %26 = arith.xori %24, %25 : vector<16x128xi32>
    %c16_i32_4 = arith.constant 16 : i32
    %27 = vector.broadcast %c16_i32_4 : i32 to vector<16x128xi32>
    %28 = arith.shrui %26, %27 : vector<16x128xi32>
    %29 = arith.xori %26, %28 : vector<16x128xi32>
    %c2146121005_i32_5 = arith.constant 2146121005 : i32
    %30 = vector.broadcast %c2146121005_i32_5 : i32 to vector<16x128xi32>
    %31 = arith.muli %29, %30 : vector<16x128xi32>
    %c15_i32_6 = arith.constant 15 : i32
    %32 = vector.broadcast %c15_i32_6 : i32 to vector<16x128xi32>
    %33 = arith.shrui %31, %32 : vector<16x128xi32>
    %34 = arith.xori %31, %33 : vector<16x128xi32>
    %c-2073254261_i32_7 = arith.constant -2073254261 : i32
    %35 = vector.broadcast %c-2073254261_i32_7 : i32 to vector<16x128xi32>
    %36 = arith.muli %34, %35 : vector<16x128xi32>
    %c16_i32_8 = arith.constant 16 : i32
    %37 = vector.broadcast %c16_i32_8 : i32 to vector<16x128xi32>
    %38 = arith.shrui %36, %37 : vector<16x128xi32>
    %39 = arith.xori %36, %38 : vector<16x128xi32>
    %c-2052912941_i32 = arith.constant -2052912941 : i32
    %40 = vector.broadcast %c-2052912941_i32 : i32 to vector<16x128xi32>
    %41 = arith.xori %24, %40 : vector<16x128xi32>
    %c16_i32_9 = arith.constant 16 : i32
    %42 = vector.broadcast %c16_i32_9 : i32 to vector<16x128xi32>
    %43 = arith.shrui %41, %42 : vector<16x128xi32>
    %44 = arith.xori %41, %43 : vector<16x128xi32>
    %c2146121005_i32_10 = arith.constant 2146121005 : i32
    %45 = vector.broadcast %c2146121005_i32_10 : i32 to vector<16x128xi32>
    %46 = arith.muli %44, %45 : vector<16x128xi32>
    %c15_i32_11 = arith.constant 15 : i32
    %47 = vector.broadcast %c15_i32_11 : i32 to vector<16x128xi32>
    %48 = arith.shrui %46, %47 : vector<16x128xi32>
    %49 = arith.xori %46, %48 : vector<16x128xi32>
    %c-2073254261_i32_12 = arith.constant -2073254261 : i32
    %50 = vector.broadcast %c-2073254261_i32_12 : i32 to vector<16x128xi32>
    %51 = arith.muli %49, %50 : vector<16x128xi32>
    %c16_i32_13 = arith.constant 16 : i32
    %52 = vector.broadcast %c16_i32_13 : i32 to vector<16x128xi32>
    %53 = arith.shrui %51, %52 : vector<16x128xi32>
    %54 = arith.xori %51, %53 : vector<16x128xi32>
    %c8_i32 = arith.constant 8 : i32
    %55 = vector.broadcast %c8_i32 : i32 to vector<16x128xi32>
    %56 = arith.shrui %39, %55 : vector<16x128xi32>
    %57 = arith.sitofp %56 : vector<16x128xi32> to vector<16x128xf32>
    %c8_i32_14 = arith.constant 8 : i32
    %58 = vector.broadcast %c8_i32_14 : i32 to vector<16x128xi32>
    %59 = arith.shrui %54, %58 : vector<16x128xi32>
    %60 = arith.sitofp %59 : vector<16x128xi32> to vector<16x128xf32>
    %cst = arith.constant 1.000000e+00 : f32
    %61 = vector.broadcast %cst : f32 to vector<16x128xf32>
    %62 = arith.addf %57, %61 : vector<16x128xf32>
    %cst_15 = arith.constant 5.96046448E-8 : f32
    %63 = vector.broadcast %cst_15 : f32 to vector<16x128xf32>
    %64 = arith.mulf %62, %63 : vector<16x128xf32>
    %cst_16 = arith.constant 5.96046448E-8 : f32
    %65 = vector.broadcast %cst_16 : f32 to vector<16x128xf32>
    %66 = arith.mulf %60, %65 : vector<16x128xf32>
    %67 = math.log %64 : vector<16x128xf32>
    %cst_17 = arith.constant -2.000000e+00 : f32
    %68 = vector.broadcast %cst_17 : f32 to vector<16x128xf32>
    %69 = arith.mulf %68, %67 : vector<16x128xf32>
    %70 = math.sqrt %69 : vector<16x128xf32>
    %cst_18 = arith.constant 6.28318548 : f32
    %71 = vector.broadcast %cst_18 : f32 to vector<16x128xf32>
    %72 = arith.mulf %71, %66 : vector<16x128xf32>
    %73 = math.cos %72 : vector<16x128xf32>
    %74 = arith.mulf %70, %73 : vector<16x128xf32>
    %cst_19 = arith.constant 1.000000e+00 : f32
    %75 = vector.broadcast %cst_19 : f32 to vector<16x128xf32>
    %76 = arith.mulf %75, %74 : vector<16x128xf32>
    %cst_20 = arith.constant 1.000000e+00 : f32
    %77 = vector.broadcast %cst_20 : f32 to vector<16x128xf32>
    %78 = arith.addf %77, %76 : vector<16x128xf32>
    %79 = arith.mulf %0, %78 : vector<16x128xf32>
    %cst_21 = arith.constant 0.000000e+00 : f32
    %80 = vector.broadcast %cst_21 : f32 to vector<16x128xf32>
    %81 = arith.maximumf %79, %80 : vector<16x128xf32>
    %c0_22 = arith.constant 0 : index
    %c0_23 = arith.constant 0 : index
    %82 = vector.load %arg3[%c0_22, %c0_23] : memref<16x128xf32, #tpu.memory_space<vmem>>, vector<16x128xf32>
    tpu.vector_store %arg3[%c0_22, %c0_23], %81 {strides = array<i32>} : memref<16x128xf32, #tpu.memory_space<vmem>>, vector<16x128xf32>,
    return
  }
  func.func @transform_0(%arg0: i32, %arg1: memref<1xi32, #tpu.memory_space<smem>>) -> (i32, i32) {
    %c0_i32 = arith.constant 0 : i32
    %c0_i32_0 = arith.constant 0 : i32
    return %arg0, %c0_i32 : i32, i32
  }
  func.func @transform_1(%arg0: i32, %arg1: memref<1xi32, #tpu.memory_space<smem>>) -> (i32, i32) {
    %c0_i32 = arith.constant 0 : i32
    %c0_i32_0 = arith.constant 0 : i32
    return %arg0, %c0_i32 : i32, i32
  }
}

</mosaic_0001>

<llo_original>
// kernel: tpu_custom_call.1
$region0: #{tpu_custom_call.1}
  #allocation0 [shape = 'u32[]', space=smem, size = 0x4, offset = 0x4, fixed_abs, tag = 'smem constant byte address 0x4 - core index']
  #allocation1 [shape = 'u32[144,128]{1,0:T(1,128)}', space=vmem, size = 0x12000, scoped, tag = 'internal scratch']
  #allocation2 [shape = 's32[1]{0}', space=sflag, size = 0x4, scoped, tag = 'scoped memory for tpu_custom_call.1']
  #allocation3 [shape = 's32[1]{0:T(128)S(6)}', space=smem, size = 0x200, scoped, tag = 'prefetched SMEM operand 0']
  %s0 = inlined_call_operand.<no memory space> [shape: s32[1], index: 0, kind: input, shape index: {}]
  %s1 = inlined_call_operand.hbm [shape: f32[16,128], index: 1, kind: input, shape index: {}]
  %s2 = inlined_call_operand.hbm [shape: f32[16,128], index: 2, kind: output, shape index: {}]
  %s3 = sld [smem:[#allocation0]]
  $region18: #{tpu_custom_call.1} parent=0
    _
  %s5 = ssub.s32 1, %s3
  %s6 = scalar_select 0, %s5, %s3
  %7 = sst [smem:[#allocation3]] %s0
  $region1: #{tpu_custom_call.1} parent=0
    #allocation4 [shape = 'u8[8192]{0}', space=vmem, size = 0x2000, scoped, tag = 'input window, operand 1, single buffered']
    #allocation5 [shape = 's32[1]{0}', space=sflag, size = 0x4, scoped, tag = 'scoped memory for tpu_custom_call.1']
    #allocation6 [shape = 's32[1]{0}', space=sflag, size = 0x4, scoped, tag = 'scoped memory for tpu_custom_call.1']
    #allocation7 [shape = 'u8[8192]{0}', space=vmem, size = 0x2000, scoped, tag = 'output window, operand 0, single buffered']
    %8 = vsyncpa [#allocation5], 0
    %9 = vsyncpa [#allocation6], 0
    // Predicated region
    $region2: #{tpu_custom_call.1} parent=1 // pred_check
      _
    $region3: #{tpu_custom_call.1} parent=1 // pred_check_branch
      %11 = sbr.rel (0) target = $region5
    $region4: #{tpu_custom_call.1} parent=1 // pred_region
      %s13 = ssub.s32 256, 256
      %14 = vsyncadd [#allocation5], %s13
      %s15 = sshll.u32 [#allocation4], 4
      %s16 = int_to_ptr.vmem [resolvable:$true] %s15
      %21 = dma.hbm_to_vmem [thread:$0]  %s1, 256, %s16, [#allocation5], 128, 128, 8
    $region5: #{tpu_custom_call.1} parent=1 // pred_fallthru
      _
    // Predicated region
    $region6: #{tpu_custom_call.1} parent=1 // pred_check
      _
    $region7: #{tpu_custom_call.1} parent=1 // pred_check_branch
      %23 = sbr.rel (0) target = $region9
    $region8: #{tpu_custom_call.1} parent=1 // pred_region
      %24 = dma.done [#allocation5], 256
    $region9: #{tpu_custom_call.1} parent=1 // pred_fallthru
      _
    %v25 = vld [vmem:[#allocation4] sm:$0xff]
    %v26 = vld [vmem:[#allocation4 + $0x8] sm:$0xff]
    %v27 = vlaneseq
    %v28 = vshrl.u32 %v27, 7
    %v29 = vadd.s32 %v28, 8
    %s30 = smul.u32 0, 16
    %v31 = vstv %s30
    %v32 = vadd.s32 %v28, %v31
    %v33 = vadd.s32 %v29, %v31
    %v34 = vlaneseq
    %v35 = vand.u32 %v34, 127
    %v36 = vmul.u32 %v32, 128
    %v37 = vmul.u32 %v33, 128
    %v38 = vadd.s32 %v36, %v35
    %v39 = vadd.s32 %v37, %v35
    %s40 = sld [smem:[#allocation3]]
    %v41 = vstv %s40
    %v42 = vxor.u32 %v38, %v41
    %v43 = vxor.u32 %v39, %v41
    %v44 = vshrl.u32 %v42, 16
    %v45 = vshrl.u32 %v43, 16
    %v46 = vxor.u32 %v42, %v44
    %v47 = vxor.u32 %v43, %v45
    %v48 = vmul.u32 %v46, 2146121005
    %v49 = vmul.u32 %v47, 2146121005
    %v50 = vshrl.u32 %v48, 15
    %v51 = vshrl.u32 %v49, 15
    %v52 = vxor.u32 %v48, %v50
    %v53 = vxor.u32 %v49, %v51
    %v54 = vmul.u32 %v52, 2221713035
    %v55 = vmul.u32 %v53, 2221713035
    %v56 = vshrl.u32 %v54, 16
    %v57 = vshrl.u32 %v55, 16
    %v58 = vxor.u32 %v54, %v56
    %v59 = vxor.u32 %v55, %v57
    %v60 = vxor.u32 %v58, 608135816
    %v61 = vxor.u32 %v59, 608135816
    %v62 = vshrl.u32 %v60, 16
    %v63 = vshrl.u32 %v61, 16
    %v64 = vxor.u32 %v60, %v62
    %v65 = vxor.u32 %v61, %v63
    %v66 = vmul.u32 %v64, 2146121005
    %v67 = vmul.u32 %v65, 2146121005
    %v68 = vshrl.u32 %v66, 15
    %v69 = vshrl.u32 %v67, 15
    %v70 = vxor.u32 %v66, %v68
    %v71 = vxor.u32 %v67, %v69
    %v72 = vmul.u32 %v70, 2221713035
    %v73 = vmul.u32 %v71, 2221713035
    %v74 = vshrl.u32 %v72, 16
    %v75 = vshrl.u32 %v73, 16
    %v76 = vxor.u32 %v72, %v74
    %v77 = vxor.u32 %v73, %v75
    %v78 = vxor.u32 %v58, 2242054355
    %v79 = vxor.u32 %v59, 2242054355
    %v80 = vshrl.u32 %v78, 16
    %v81 = vshrl.u32 %v79, 16
    %v82 = vxor.u32 %v78, %v80
    %v83 = vxor.u32 %v79, %v81
    %v84 = vmul.u32 %v82, 2146121005
    %v85 = vmul.u32 %v83, 2146121005
    %v86 = vshrl.u32 %v84, 15
    %v87 = vshrl.u32 %v85, 15
    %v88 = vxor.u32 %v84, %v86
    %v89 = vxor.u32 %v85, %v87
    %v90 = vmul.u32 %v88, 2221713035
    %v91 = vmul.u32 %v89, 2221713035
    %v92 = vshrl.u32 %v90, 16
    %v93 = vshrl.u32 %v91, 16
    %v94 = vxor.u32 %v90, %v92
    %v95 = vxor.u32 %v91, %v93
    %v96 = vshrl.u32 %v76, 8
    %v97 = vshrl.u32 %v77, 8
    %v98 = vcvt.s32.f32 %v96
    %v99 = vcvt.s32.f32 %v97
    %v100 = vshrl.u32 %v94, 8
    %v101 = vshrl.u32 %v95, 8
    %v102 = vcvt.s32.f32 %v100
    %v103 = vcvt.s32.f32 %v101
    %v104 = vadd.f32 %v98, 1.0
    %v105 = vadd.f32 %v99, 1.0
    %v106 = vmul.f32 %v104, 5.9604645e-08
    %v107 = vmul.f32 %v105, 5.9604645e-08
    %v108 = vmul.f32 %v102, 5.9604645e-08
    %v109 = vmul.f32 %v103, 5.9604645e-08
    %v110 = vlog2.pop %v106
    %v111 = vmul.f32 %v110, 0.6931472
    %v112 = vlog2.pop %v107
    %v113 = vmul.f32 %v112, 0.6931472
    %v114 = vmul.f32 %v111, -2.0
    %v115 = vmul.f32 %v113, -2.0
    %v116 = vrsqrt.pop %v114
    %v117 = vmul.f32 %v114, %v116
    %vm118 = vcmp.eq.f32.partialorder %v114, inf
    %v119 = vsel %vm118, %v114, %v117
    %vm120 = vcmp.eq.f32.partialorder %v114, 0.0
    %v121 = vand.u32 %v114, 2147483648
    %v122 = vsel %vm120, %v121, %v119
    %v123 = vrsqrt.pop %v115
    %v124 = vmul.f32 %v115, %v123
    %vm125 = vcmp.eq.f32.partialorder %v115, inf
    %v126 = vsel %vm125, %v115, %v124
    %vm127 = vcmp.eq.f32.partialorder %v115, 0.0
    %v128 = vand.u32 %v115, 2147483648
    %v129 = vsel %vm127, %v128, %v126
    %v130 = vmul.f32 %v108, 6.2831855
    %v131 = vmul.f32 %v109, 6.2831855
    %v132 = vand.u32 2147483647, %v130
    %vm133 = vcmp.le.f32.partialorder %v132, 0.7853982
    %vm134 = vcmp.lt.s32.totalorder %v130, 0
    %v135 = vand.u32 %v130, 2139095040
    %v136 = vshrl.u32 %v135, 23
    %v137 = vsub.s32 %v136, 127
    %v138 = vand.u32 2147483647, %v130
    %v139 = vand.u32 %v138, 8388607
    %v140 = vor.u32 %v139, 8388608
    %v141 = vsub.s32 0, %v140
    %v142 = vadd.s32 %v137, 1
    %vm143 = vcmp.gt.s32.totalorder %v142, 0
    %v144 = vsel %vm143, %v142, 0
    %v145 = vshrl.u32 %v144, 5
    %v146 = vand.u32 %v144, 31
    %v147 = vsub.s32 32, %v146
    %v148 = vshrl.u32 683565275, %v147
    %v149 = vshll.u32 683565275, %v146
    %v150 = vshrl.u32 2475754826, %v147
    %v151 = vor.u32 %v149, %v150
    %v152 = vshll.u32 2475754826, %v146
    %v153 = vshrl.u32 2131351028, %v147
    %v154 = vor.u32 %v152, %v153
    %v155 = vshll.u32 2131351028, %v146
    %v156 = vshrl.u32 2102212464, %v147
    %v157 = vor.u32 %v155, %v156
    %v158 = vshll.u32 2102212464, %v146
    %v159 = vshrl.u32 920167782, %v147
    %v160 = vor.u32 %v158, %v159
    %v161 = vshll.u32 920167782, %v146
    %v162 = vshrl.u32 1326507024, %v147
    %v163 = vor.u32 %v161, %v162
    %vm164 = vcmp.lt.s32.totalorder %v145, 1
    %vm165 = vcmp.lt.s32.totalorder %v145, 2
    %vm166 = vcmp.lt.s32.totalorder %v145, 3
    %vm167 = vcmp.lt.s32.totalorder %v145, 4
    %v168 = vsel %vm164, %v148, %v151
    %v169 = vsel %vm167, %v157, 2102212464
    %v170 = vsel %vm166, %v154, %v169
    %v171 = vsel %vm165, %v168, %v170
    %v172 = vsel %vm164, %v151, %v154
    %v173 = vsel %vm167, %v160, 920167782
    %v174 = vsel %vm166, %v157, %v173
    %v175 = vsel %vm165, %v172, %v174
    %v176 = vsel %vm164, %v154, %v157
    %v177 = vsel %vm167, %v163, 1326507024
    %v178 = vsel %vm166, %v160, %v177
    %v179 = vsel %vm165, %v176, %v178
    %v180 = vshll.u32 %v140, 8
    %v181 = vmul.u32.u64.compose %v180, %v179
    %v182 = vextract.low.u32 %v181
    %v183 = vextract.high.u32 %v181
    %v184 = vmul.u32.u64.compose %v180, %v175
    %v185 = vextract.low.u32 %v184
    %v186 = vextract.high.u32 %v184
    %v187 = vmul.u32 %v180, %v171
    %v188 = vadd.s32 %v183, %v185
    %vm189 = vc.u32 %v183, %v185
    %v190 = vadd.s32 %v186, 1
    %v191 = vsel %vm189, %v190, %v186
    %v192 = vadd.s32 %v187, %v191
    %v193 = vadd.s32 %v192, 536870912
    %v194 = vshrl.u32 %v193, 30
    %v195 = vshll.u32 %v194, 30
    %v196 = vsub.s32 %v192, %v195
    %vm197 = vcmp.lt.s32.totalorder %v196, 0
    %v198 = vsub.s32 0, %v196
    %v199 = vsel %vm197, %v198, %v196
    %v200 = vclz %v199
    %v201 = vsub.s32 %v200, 2
    %vm202 = vcmp.gt.s32.totalorder 0, %v201
    %v203 = vsel %vm202, 0, %v201
    %v204 = vsub.s32 32, %v203
    %v205 = vshll.u32 %v196, %v203
    %v206 = vshrl.u32 %v188, %v204
    %v207 = vor.u32 %v205, %v206
    %v208 = vsub.s32 4294967266, %v203
    %v209 = vadd.s32 %v208, 127
    %v210 = vshll.u32 %v209, 23
    %v211 = vor.u32 4788187, %v210
    %v212 = vand.u32 2147483647, %v211
    %v214 = vcvt.s32.f32 %v207
    %v215 = vmul.f32 %v214, %v212
    %v216 = vxor.u32 %v215, 2147483648
    %v217 = vsel %vm134, %v216, %v215
    %v218 = vsub.s32 4, %v194
    %v219 = vsel %vm134, %v218, %v194
    %v220 = vsel %vm133, %v130, %v217
    %v221 = vsel %vm133, 0, %v219
    %v222 = vcosq.f32.pop %v220
    %v223 = vsinq.f32.pop %v220
    %vm224 = vweird.f32 %v130
    %v225 = vand.u32 %v221, 3
    %vm226 = vcmp.lt.s32.totalorder %v225, 2
    %vm227 = vcmp.eq.s32.totalorder %v225, 0
    %v228 = vxor.u32 %v223, 2147483648
    %v229 = vsel %vm227, %v222, %v228
    %vm230 = vcmp.eq.s32.totalorder %v225, 2
    %v231 = vxor.u32 %v222, 2147483648
    %v232 = vsel %vm230, %v231, %v223
    %v233 = vsel %vm226, %v229, %v232
    %v234 = vsel %vm224, nan, %v233
    %v235 = vand.u32 2147483647, %v131
    %vm236 = vcmp.le.f32.partialorder %v235, 0.7853982
    %vm237 = vcmp.lt.s32.totalorder %v131, 0
    %v238 = vand.u32 %v131, 2139095040
    %v239 = vshrl.u32 %v238, 23
    %v240 = vsub.s32 %v239, 127
    %v241 = vand.u32 2147483647, %v131
    %v242 = vand.u32 %v241, 8388607
    %v243 = vor.u32 %v242, 8388608
    %v244 = vsub.s32 0, %v243
    %v245 = vadd.s32 %v240, 1
    %vm246 = vcmp.gt.s32.totalorder %v245, 0
    %v247 = vsel %vm246, %v245, 0
    %v248 = vshrl.u32 %v247, 5
    %v249 = vand.u32 %v247, 31
    %v250 = vsub.s32 32, %v249
    %v251 = vshrl.u32 683565275, %v250
    %v252 = vshll.u32 683565275, %v249
    %v253 = vshrl.u32 2475754826, %v250
    %v254 = vor.u32 %v252, %v253
    %v255 = vshll.u32 2475754826, %v249
    %v256 = vshrl.u32 2131351028, %v250
    %v257 = vor.u32 %v255, %v256
    %v258 = vshll.u32 2131351028, %v249
    %v259 = vshrl.u32 2102212464, %v250
    %v260 = vor.u32 %v258, %v259
    %v261 = vshll.u32 2102212464, %v249
    %v262 = vshrl.u32 920167782, %v250
    %v263 = vor.u32 %v261, %v262
    %v264 = vshll.u32 920167782, %v249
    %v265 = vshrl.u32 1326507024, %v250
    %v266 = vor.u32 %v264, %v265
    %vm267 = vcmp.lt.s32.totalorder %v248, 1
    %vm268 = vcmp.lt.s32.totalorder %v248, 2
    %vm269 = vcmp.lt.s32.totalorder %v248, 3
    %vm270 = vcmp.lt.s32.totalorder %v248, 4
    %v271 = vsel %vm267, %v251, %v254
    %v272 = vsel %vm270, %v260, 2102212464
    %v273 = vsel %vm269, %v257, %v272
    %v274 = vsel %vm268, %v271, %v273
    %v275 = vsel %vm267, %v254, %v257
    %v276 = vsel %vm270, %v263, 920167782
    %v277 = vsel %vm269, %v260, %v276
    %v278 = vsel %vm268, %v275, %v277
    %v279 = vsel %vm267, %v257, %v260
    %v280 = vsel %vm270, %v266, 1326507024
    %v281 = vsel %vm269, %v263, %v280
    %v282 = vsel %vm268, %v279, %v281
    %v283 = vshll.u32 %v243, 8
    %v284 = vmul.u32.u64.compose %v283, %v282
    %v285 = vextract.low.u32 %v284
    %v286 = vextract.high.u32 %v284
    %v287 = vmul.u32.u64.compose %v283, %v278
    %v288 = vextract.low.u32 %v287
    %v289 = vextract.high.u32 %v287
    %v290 = vmul.u32 %v283, %v274
    %v291 = vadd.s32 %v286, %v288
    %vm292 = vc.u32 %v286, %v288
    %v293 = vadd.s32 %v289, 1
    %v294 = vsel %vm292, %v293, %v289
    %v295 = vadd.s32 %v290, %v294
    %v296 = vadd.s32 %v295, 536870912
    %v297 = vshrl.u32 %v296, 30
    %v298 = vshll.u32 %v297, 30
    %v299 = vsub.s32 %v295, %v298
    %vm300 = vcmp.lt.s32.totalorder %v299, 0
    %v301 = vsub.s32 0, %v299
    %v302 = vsel %vm300, %v301, %v299
    %v303 = vclz %v302
    %v304 = vsub.s32 %v303, 2
    %vm305 = vcmp.gt.s32.totalorder 0, %v304
    %v306 = vsel %vm305, 0, %v304
    %v307 = vsub.s32 32, %v306
    %v308 = vshll.u32 %v299, %v306
    %v309 = vshrl.u32 %v291, %v307
    %v310 = vor.u32 %v308, %v309
    %v311 = vsub.s32 4294967266, %v306
    %v312 = vadd.s32 %v311, 127
    %v313 = vshll.u32 %v312, 23
    %v314 = vor.u32 4788187, %v313
    %v315 = vand.u32 2147483647, %v314
    %v317 = vcvt.s32.f32 %v310
    %v318 = vmul.f32 %v317, %v315
    %v319 = vxor.u32 %v318, 2147483648
    %v320 = vsel %vm237, %v319, %v318
    %v321 = vsub.s32 4, %v297
    %v322 = vsel %vm237, %v321, %v297
    %v323 = vsel %vm236, %v131, %v320
    %v324 = vsel %vm236, 0, %v322
    %v325 = vcosq.f32.pop %v323
    %v326 = vsinq.f32.pop %v323
    %vm327 = vweird.f32 %v131
    %v328 = vand.u32 %v324, 3
    %vm329 = vcmp.lt.s32.totalorder %v328, 2
    %vm330 = vcmp.eq.s32.totalorder %v328, 0
    %v331 = vxor.u32 %v326, 2147483648
    %v332 = vsel %vm330, %v325, %v331
    %vm333 = vcmp.eq.s32.totalorder %v328, 2
    %v334 = vxor.u32 %v325, 2147483648
    %v335 = vsel %vm333, %v334, %v326
    %v336 = vsel %vm329, %v332, %v335
    %v337 = vsel %vm327, nan, %v336
    %v338 = vmul.f32 %v122, %v234
    %v339 = vmul.f32 %v129, %v337
    %v340 = vadd.f32 %v338, 1.0
    %v341 = vadd.f32 %v339, 1.0
    %v342 = vmul.f32 %v25, %v340
    %v343 = vmul.f32 %v26, %v341
    %v344 = vmax.f32 %v342, 0.0
    %v345 = vmax.f32 %v343, 0.0
    %346 = vst [vmem:[#allocation7] sm:$0xff] %v344
    %347 = vst [vmem:[#allocation7 + $0x8] sm:$0xff] %v345
    // Predicated region
    $region10: #{tpu_custom_call.1} parent=1 // pred_check
      _
    $region11: #{tpu_custom_call.1} parent=1 // pred_check_branch
      %349 = sbr.rel (0) target = $region13
    $region12: #{tpu_custom_call.1} parent=1 // pred_region
      %s351 = ssub.s32 256, 256
      %352 = vsyncadd [#allocation6], %s351
      %s353 = sshll.u32 [#allocation7], 4
      %s354 = int_to_ptr.vmem [resolvable:$true] %s353
      %359 = dma.vmem_to_hbm [thread:$0]  %s354, 256, %s2, [#allocation6], 128, 128, 8
    $region13: #{tpu_custom_call.1} parent=1 // pred_fallthru
      _
    // Predicated region
    $region14: #{tpu_custom_call.1} parent=1 // pred_check
      _
    $region15: #{tpu_custom_call.1} parent=1 // pred_check_branch
      %361 = sbr.rel (0) target = $region17
    $region16: #{tpu_custom_call.1} parent=1 // pred_region
      %362 = dma.done [#allocation6], 256
    $region17: #{tpu_custom_call.1} parent=1 // pred_fallthru
      _
    %363 = vsyncpa [#allocation5], 1
    %364 = vsyncpa [#allocation6], 1

</llo_original>
